<compile_context>
chip_gen: v7x
topology: tpu7x:2x2x1
jax: 0.10.0
libtpu: 0.0.40
codegen_flags: <defaults>
</compile_context>

<pallas_src>
import functools
import math

import jax
import jax.numpy as jnp
from jax import lax
from jax.experimental import pallas as pl
from jax.experimental.pallas import tpu as pltpu

EPS = 1e-5
_MAX_LANE_WIDTH = 4096          # cap on the re-laned row width (channels-last)


# ---------------------------------------------------------------------------
# Hardware-aware budgets
# ---------------------------------------------------------------------------

def _vmem_capacity_bytes():
    try:
        info = pltpu.get_tpu_info()
        cap = int(getattr(info, "vmem_capacity_bytes", 0))
        if cap > 0:
            return cap
    except Exception:
        pass
    return 64 << 20        # conservative default = v7x per-TensorCore VMEM


def _vmem_cap_bytes():
    # Leave headroom for compiler-internal scratch: <=60% of physical VMEM
    # (~38 MiB on v7x, ~77 MiB on v5e/v6e).
    return int(min(_vmem_capacity_bytes() * 0.6, 96 << 20))


def _target_tile_bytes():
    # ~8 MiB x-tiles: double-buffered in+out of the apply pass is ~4x this,
    # which stays under the cap above on every generation while cutting the
    # ~0.35 us/step overhead to <10% of the step.
    return int(min(8 << 20, _vmem_cap_bytes() // 5))


def _fused_budget_bytes():
    return int(_vmem_capacity_bytes() * 0.35)


def _fused_need_bytes(n_elems, itemsize):
    # in + out buffers in the input dtype plus ~3 f32-sized temporaries.
    return n_elems * (2 * itemsize + 12) + (1 << 20)


def _compiler_params(semantics, need_bytes):
    limit = int(min(max(need_bytes + (2 << 20), 16 << 20), _vmem_cap_bytes()))
    if semantics is None:
        return pltpu.CompilerParams(vmem_limit_bytes=limit)
    return pltpu.CompilerParams(dimension_semantics=semantics,
                                vmem_limit_bytes=limit)


# ---------------------------------------------------------------------------
# Small trace-time helpers
# ---------------------------------------------------------------------------

def _cdiv(a, b):
    return -(-a // b)


def _pick_block(total, target, step):
    """Largest multiple of `step` <= max(target, step) that divides `total`.
    Returns (block, needs_mask); needs_mask=True when no divisor exists and a
    non-dividing block (in-kernel masking + boundary clipping) is used."""
    target = max(step, (target // step) * step)
    b = target
    while b >= step:
        if total % b == 0:
            return b, False
        b -= step
    return target, True


def _pick_lane_factor(rows, c):
    """Channels-last re-laning factor k: k divides `rows` (so the (rows//k,
    k*c) view is a free reshape -- no pad copy), LW = k*c <= _MAX_LANE_WIDTH,
    preferring 128-aligned and >=512-wide lane rows (unmasked full stores)."""
    best_k, best_score = 1, None
    for k in range(1, max(1, _MAX_LANE_WIDTH // c) + 1):
        if rows % k:
            continue
        lw = k * c
        score = (lw % 128 == 0, min(lw, 512), -lw)
        if best_score is None or score > best_score:
            best_k, best_score = k, score
    return best_k


def _finalize_affine(ch_sum, ch_sq, count, gamma, beta):
    """Per-channel mean / biased var -> fused scale/shift (f32, tiny)."""
    mean = ch_sum / count
    # E[x^2] - mean^2 with f32 accumulation; clamp guards cancellation
    # residue.  (The fused fast path uses the better-conditioned two-pass
    # form since x is resident in VMEM there.)
    var = jnp.maximum(ch_sq / count - mean * mean, 0.0)
    scale = gamma.astype(jnp.float32) * lax.rsqrt(var + EPS)
    shift = beta.astype(jnp.float32) - mean * scale
    return scale, shift


# ---------------------------------------------------------------------------
# Kernels
# ---------------------------------------------------------------------------

def _apply_kernel(x_ref, scale_ref, shift_ref, o_ref):
    """y = x * scale + shift (scale/shift broadcast over the tile)."""
    x = x_ref[...].astype(jnp.float32)
    o_ref[...] = (x * scale_ref[...] + shift_ref[...]).astype(o_ref.dtype)


def _stats_cl_kernel(x_ref, sum_ref, sq_ref, *, rows_total, block_rows,
                     needs_mask, accumulate):
    """Channels-last stats on one (TFR, LW) tile.  accumulate=False: each
    grid step writes its own partial ("parallel", megacore-friendly);
    accumulate=True: resident accumulator ("arbitrary" grid axis)."""
    if accumulate:
        @pl.when(pl.program_id(0) == 0)
        def _():
            sum_ref[...] = jnp.zeros_like(sum_ref)
            sq_ref[...] = jnp.zeros_like(sq_ref)

    x = x_ref[...].astype(jnp.float32)
    if needs_mask:
        valid = rows_total - pl.program_id(0) * block_rows
        rows = lax.broadcasted_iota(jnp.int32, x.shape, 0)
        x = jnp.where(rows < valid, x, 0.0)
    s = jnp.sum(x, axis=0, keepdims=True)
    q = jnp.sum(x * x, axis=0, keepdims=True)
    if accumulate:
        sum_ref[...] += s
        sq_ref[...] += q
    else:
        sum_ref[...] = s
        sq_ref[...] = q


def _stats_cf_full(x_ref, sum_ref, sq_ref, *, n_total, block_n, needs_mask):
    """Channels-first stats, full-M blocks (BN, C, M).  The ragged last
    N-block is masked AFTER the lane reduction (cost ~BN*C, negligible)."""
    x = x_ref[...].astype(jnp.float32)
    s = jnp.sum(x, axis=2, keepdims=True)          # (BN, C, 1)
    q = jnp.sum(x * x, axis=2, keepdims=True)
    if needs_mask:
        valid = n_total - pl.program_id(0) * block_n
        rows = lax.broadcasted_iota(jnp.int32, s.shape, 0)
        keep = rows < valid
        s = jnp.where(keep, s, 0.0)
        q = jnp.where(keep, q, 0.0)
    sum_ref[...] = jnp.sum(s, axis=0, keepdims=True)
    sq_ref[...] = jnp.sum(q, axis=0, keepdims=True)


def _stats_cf_split(x_ref, sum_ref, sq_ref, *, m_total, block_m, needs_mask):
    """Channels-first stats when one sample exceeds the tile budget:
    (1, C, TM) blocks, resident per-sample accumulator over the m axis."""
    @pl.when(pl.program_id(1) == 0)
    def _():
        sum_ref[...] = jnp.zeros_like(sum_ref)
        sq_ref[...] = jnp.zeros_like(sq_ref)

    x = x_ref[...].astype(jnp.float32)             # (1, C, TM)
    if needs_mask:
        valid = m_total - pl.program_id(1) * block_m
        lanes = lax.broadcasted_iota(jnp.int32, x.shape, 2)
        x = jnp.where(lanes < valid, x, 0.0)
    sum_ref[...] += jnp.sum(x, axis=2, keepdims=True)
    sq_ref[...] += jnp.sum(x * x, axis=2, keepdims=True)


def _fused_cl_kernel(x_ref, g_ref, b_ref, o_ref, *, inv_count):
    """Whole-array channels-last BN in one shot (x read from HBM once,
    two-pass mean/var, rsqrt on the EUP)."""
    x = x_ref[...].astype(jnp.float32)
    mean = jnp.sum(x, axis=0, keepdims=True) * inv_count
    d = x - mean
    var = jnp.sum(d * d, axis=0, keepdims=True) * inv_count
    scale = g_ref[...].astype(jnp.float32) * lax.rsqrt(var + EPS)
    o_ref[...] = (d * scale + b_ref[...].astype(jnp.float32)).astype(o_ref.dtype)


def _fused_cf_kernel(x_ref, g_ref, b_ref, o_ref, *, inv_count):
    """Whole-array channels-first ((N, C, M)) BN in one shot."""
    x = x_ref[...].astype(jnp.float32)
    s = jnp.sum(jnp.sum(x, axis=2, keepdims=True), axis=0, keepdims=True)
    mean = s * inv_count                            # (1, C, 1)
    d = x - mean
    v = jnp.sum(jnp.sum(d * d, axis=2, keepdims=True), axis=0, keepdims=True)
    scale = g_ref[...].astype(jnp.float32) * lax.rsqrt(v * inv_count + EPS)
    o_ref[...] = (d * scale + b_ref[...].astype(jnp.float32)).astype(o_ref.dtype)


# ---------------------------------------------------------------------------
# Fused single-kernel fast paths (whole array resident in VMEM)
# ---------------------------------------------------------------------------

def _fused_ok(shape, dtype, lane_dim):
    n = 1
    for s in shape:
        n *= int(s)
    need = _fused_need_bytes(n, jnp.dtype(dtype).itemsize)
    if n <= (1 << 16):                  # tiny: launch/glue overhead dominates
        return need <= _vmem_cap_bytes()
    lane_ok = (lane_dim % 128 == 0) or (lane_dim >= 256)
    return lane_ok and need <= _fused_budget_bytes()


def _bn_channels_last_fused(x2d, gamma, beta):
    R, C = x2d.shape
    need = _fused_need_bytes(R * C, jnp.dtype(x2d.dtype).itemsize)
    return pl.pallas_call(
        functools.partial(_fused_cl_kernel, inv_count=1.0 / float(R)),
        out_shape=jax.ShapeDtypeStruct((R, C), x2d.dtype),
        compiler_params=_compiler_params(None, need),
    )(x2d,
      gamma.reshape(1, C).astype(jnp.float32),
      beta.reshape(1, C).astype(jnp.float32))


def _bn_channels_first_fused(x, gamma, beta):
    N, C, M = x.shape
    need = _fused_need_bytes(N * C * M, jnp.dtype(x.dtype).itemsize)
    return pl.pallas_call(
        functools.partial(_fused_cf_kernel, inv_count=1.0 / float(N * M)),
        out_shape=jax.ShapeDtypeStruct((N, C, M), x.dtype),
        compiler_params=_compiler_params(None, need),
    )(x,
      gamma.reshape(1, C, 1).astype(jnp.float32),
      beta.reshape(1, C, 1).astype(jnp.float32))


# ---------------------------------------------------------------------------
# Tiled two-pass, channels-last:  x2d (R, C), stats over rows
# ---------------------------------------------------------------------------

def _bn_channels_last_tiled(x2d, gamma, beta, *, tile_bytes=None):
    R, C = x2d.shape
    dt = x2d.dtype
    itemsize = jnp.dtype(dt).itemsize
    tile_bytes = int(tile_bytes or _target_tile_bytes())

    # Lane-dense flat view (FR, LW) with LW = k*C (every lane maps to a fixed
    # channel).  k divides R -> the reshape is a free view, no pad copy.
    k = _pick_lane_factor(R, C)
    pad_rows = 0
    if k * C < 128 and C < 128:
        # Rare fallback (tiny C, row count with no usable divisor): pad rows
        # so the view stays lane-dense.  Only remaining whole-array copy.
        k = 128 // math.gcd(C, 128)
        while 2 * k * C <= 512:
            k *= 2
        pad_rows = (-R) % k
        if pad_rows:
            x2d = jnp.pad(x2d, ((0, pad_rows), (0, 0)))
    LW = k * C
    FR = (R + pad_rows) // k
    xf = x2d.reshape(FR, LW)                       # free view
    aligned = (LW % 128 == 0)

    # Row tiling (big tiles; ragged tail masked / clipped, never padded).
    target_rows = max(8, (tile_bytes // (LW * itemsize)) // 8 * 8)
    if FR <= target_rows:
        TFR, needs_mask, nb = FR, False, 1
    else:
        TFR, needs_mask = _pick_block(FR, target_rows, 8)
        nb = _cdiv(FR, TFR)

    x_block = TFR * LW * itemsize
    acc_block = LW * 4

    # -- pass 1: per-lane sums.  128-aligned LW -> independent per-block
    # -- partials on a "parallel" grid (both v7x TensorCores participate);
    # -- otherwise a resident accumulator on an "arbitrary" grid.
    use_partials = aligned or nb == 1
    if use_partials:
        out_idx = lambda i: (0, i)
        stats_sem = ("parallel",)
        n_parts = nb
    else:
        out_idx = lambda i: (0, 0)
        stats_sem = ("arbitrary",)
        n_parts = 1

    sums, sqs = pl.pallas_call(
        functools.partial(_stats_cl_kernel, rows_total=FR, block_rows=TFR,
                          needs_mask=needs_mask, accumulate=not use_partials),
        out_shape=(jax.ShapeDtypeStruct((1, n_parts * LW), jnp.float32),
                   jax.ShapeDtypeStruct((1, n_parts * LW), jnp.float32)),
        grid=(nb,),
        in_specs=[pl.BlockSpec((TFR, LW), lambda i: (i, 0))],
        out_specs=(pl.BlockSpec((1, LW), out_idx),
                   pl.BlockSpec((1, LW), out_idx)),
        compiler_params=_compiler_params(stats_sem,
                                         2 * (x_block + 2 * acc_block)),
    )(xf)

    # -- tiny per-channel fold + fused affine (a handful of (C,)-sized ops) --
    ch_sum = sums.reshape(-1, C).sum(axis=0)
    ch_sq = sqs.reshape(-1, C).sum(axis=0)
    scale, shift = _finalize_affine(ch_sum, ch_sq, float(R), gamma, beta)
    scale_l = jnp.tile(scale, k).reshape(1, LW)
    shift_l = jnp.tile(shift, k).reshape(1, LW)

    # -- pass 2: y = x*scale + shift.  Fully parallel; the ragged last block
    # -- is clipped on store by Pallas, so no output slice copy is needed.
    yf = pl.pallas_call(
        _apply_kernel,
        out_shape=jax.ShapeDtypeStruct((FR, LW), dt),
        grid=(nb,),
        in_specs=[pl.BlockSpec((TFR, LW), lambda i: (i, 0)),
                  pl.BlockSpec((1, LW), lambda i: (0, 0)),
                  pl.BlockSpec((1, LW), lambda i: (0, 0))],
        out_specs=pl.BlockSpec((TFR, LW), lambda i: (i, 0)),
        compiler_params=_compiler_params(("parallel",),
                                         2 * (2 * x_block + 2 * acc_block)),
    )(xf, scale_l, shift_l)

    y = yf.reshape(R + pad_rows, C)
    if pad_rows:
        y = y[:R]
    return y


# ---------------------------------------------------------------------------
# Tiled two-pass, channels-first:  x (N, C, M), stats over (N, M)
# ---------------------------------------------------------------------------

def _bn_channels_first_tiled(x, gamma, beta, *, tile_bytes=None):
    N, C, M = x.shape
    dt = x.dtype
    itemsize = jnp.dtype(dt).itemsize
    tile_bytes = int(tile_bytes or _target_tile_bytes())
    count = float(N * M)
    sample_bytes = C * M * itemsize

    if sample_bytes <= tile_bytes:
        # ---- TM = M: one contiguous DMA per (BN, C, M) slab, grid over N ---
        BN = max(1, min(N, tile_bytes // sample_bytes))
        needs_mask = (N % BN) != 0
        gn = _cdiv(N, BN)
        x_block = BN * sample_bytes
        acc_block = C * 4

        sums, sqs = pl.pallas_call(
            functools.partial(_stats_cf_full, n_total=N, block_n=BN,
                              needs_mask=needs_mask),
            out_shape=(jax.ShapeDtypeStruct((gn, C, 1), jnp.float32),
                       jax.ShapeDtypeStruct((gn, C, 1), jnp.float32)),
            grid=(gn,),
            in_specs=[pl.BlockSpec((BN, C, M), lambda i: (i, 0, 0))],
            out_specs=(pl.BlockSpec((1, C, 1), lambda i: (i, 0, 0)),
                       pl.BlockSpec((1, C, 1), lambda i: (i, 0, 0))),
            compiler_params=_compiler_params(("parallel",),
                                             2 * (x_block + 2 * acc_block)),
        )(x)

        ch_sum = sums.sum(axis=0).reshape(-1)
        ch_sq = sqs.sum(axis=0).reshape(-1)
        scale, shift = _finalize_affine(ch_sum, ch_sq, count, gamma, beta)
        scale3 = scale.reshape(1, C, 1)
        shift3 = shift.reshape(1, C, 1)

        return pl.pallas_call(
            _apply_kernel,
            out_shape=jax.ShapeDtypeStruct((N, C, M), dt),
            grid=(gn,),
            in_specs=[pl.BlockSpec((BN, C, M), lambda i: (i, 0, 0)),
                      pl.BlockSpec((1, C, 1), lambda i: (0, 0, 0)),
                      pl.BlockSpec((1, C, 1), lambda i: (0, 0, 0))],
            out_specs=pl.BlockSpec((BN, C, M), lambda i: (i, 0, 0)),
            compiler_params=_compiler_params(("parallel",),
                                             2 * (2 * x_block + 2 * acc_block)),
        )(x, scale3, shift3)

    # ---- one sample exceeds the tile budget: split M, blocks (1, C, TM) ----
    # TODO(synk): if a single (1, C, 128) block ever exceeds VMEM (C in the
    #             millions), the channel axis would need splitting too.
    lane_budget = max(128, (tile_bytes // (C * itemsize)) // 128 * 128)
    TM, needs_mask = _pick_block(M, lane_budget, 128)
    if TM >= M:
        TM, needs_mask = M, False
    nm = _cdiv(M, TM)
    x_block = C * TM * itemsize
    acc_block = C * 4

    sums, sqs = pl.pallas_call(
        functools.partial(_stats_cf_split, m_total=M, block_m=TM,
                          needs_mask=needs_mask),
        out_shape=(jax.ShapeDtypeStruct((N, C, 1), jnp.float32),
                   jax.ShapeDtypeStruct((N, C, 1), jnp.float32)),
        grid=(N, nm),                              # reduction axis (m) last
        in_specs=[pl.BlockSpec((1, C, TM), lambda i, j: (i, 0, j))],
        out_specs=(pl.BlockSpec((1, C, 1), lambda i, j: (i, 0, 0)),
                   pl.BlockSpec((1, C, 1), lambda i, j: (i, 0, 0))),
        compiler_params=_compiler_params(("parallel", "arbitrary"),
                                         2 * (x_block + 2 * acc_block)),
    )(x)

    ch_sum = sums.sum(axis=0).reshape(-1)
    ch_sq = sqs.sum(axis=0).reshape(-1)
    scale, shift = _finalize_affine(ch_sum, ch_sq, count, gamma, beta)
    scale3 = scale.reshape(1, C, 1)
    shift3 = shift.reshape(1, C, 1)

    return pl.pallas_call(
        _apply_kernel,
        out_shape=jax.ShapeDtypeStruct((N, C, M), dt),
        grid=(N, nm),
        in_specs=[pl.BlockSpec((1, C, TM), lambda i, j: (i, 0, j)),
                  pl.BlockSpec((1, C, 1), lambda i, j: (0, 0, 0)),
                  pl.BlockSpec((1, C, 1), lambda i, j: (0, 0, 0))],
        out_specs=pl.BlockSpec((1, C, TM), lambda i, j: (i, 0, j)),
        compiler_params=_compiler_params(("parallel", "parallel"),
                                         2 * (2 * x_block + 2 * acc_block)),
    )(x, scale3, shift3)


# ---------------------------------------------------------------------------
# Public wrapper (matches the tutorial BatchNorm forward)
# ---------------------------------------------------------------------------

def batch_norm(x, gamma, beta, feature_dim):
    """Forward of the tutorial BatchNorm (training-mode batch statistics,
    eps=1e-5, biased variance, affine).  Running statistics not tracked."""
    if x.ndim == 2:                                   # (N, feature_dim)
        assert x.shape[1] == feature_dim
        if _fused_ok(x.shape, x.dtype, lane_dim=x.shape[1]):
            return _bn_channels_last_fused(x, gamma, beta)
        return _bn_channels_last_tiled(x, gamma, beta)

    if x.ndim == 3 and x.shape[-1] == feature_dim:    # (N, M, feature_dim)
        N, M, C = x.shape
        x2d = x.reshape(N * M, C)                     # free view
        if _fused_ok(x2d.shape, x.dtype, lane_dim=C):
            y = _bn_channels_last_fused(x2d, gamma, beta)
        else:
            y = _bn_channels_last_tiled(x2d, gamma, beta)
        return y.reshape(N, M, C)

    if x.ndim == 3 and x.shape[1] == feature_dim:     # (N, feature_dim, M)
        if _fused_ok(x.shape, x.dtype, lane_dim=x.shape[-1]):
            return _bn_channels_first_fused(x, gamma, beta)
        return _bn_channels_first_tiled(x, gamma, beta)

    raise ValueError(
        f"Unsupported input shape {x.shape} for feature_dim={feature_dim}")


# ---------------------------------------------------------------------------
# Pure-JAX reference + self-check
# ---------------------------------------------------------------------------

def _reference(x, gamma, beta, feature_dim):
    if x.ndim == 3 and x.shape[-1] == feature_dim:
        axes = (0, 1); g = gamma.reshape(1, 1, -1); b = beta.reshape(1, 1, -1)
    elif x.ndim == 3:
        axes = (0, 2); g = gamma.reshape(1, -1, 1); b = beta.reshape(1, -1, 1)
    else:
        axes = (0,);   g = gamma.reshape(1, -1);    b = beta.reshape(1, -1)
    mean = jnp.mean(x, axis=axes, keepdims=True)
    var = jnp.mean((x - mean) ** 2, axis=axes, keepdims=True)
    return (x - mean) * lax.rsqrt(var + EPS) * g + b


if __name__ == "__main__":
    feature_dim = 4
    N, M = 2, 16

    key = jax.random.PRNGKey(0)
    k1, k2, k3, k4, k5, k6 = jax.random.split(key, 6)

    gamma = 1.0 + 0.1 * jnp.arange(feature_dim, dtype=jnp.float32)
    beta = 0.05 * jnp.arange(feature_dim, dtype=jnp.float32)

    def _check(y, x, g, b, fd):
        ref = _reference(x, g, b, fd)
        assert y.shape == x.shape and y.dtype == x.dtype
        assert jnp.allclose(y, ref, atol=1e-4, rtol=1e-5), \
            float(jnp.max(jnp.abs(y - ref)))

    # (N, M, feature_dim) point-cloud layout  -> fused single-kernel fast path.
    x_nmc = jax.random.normal(k1, (N, M, feature_dim), jnp.float32) * 2.0 + 0.5
    y = jax.block_until_ready(batch_norm(x_nmc, gamma, beta, feature_dim))
    _check(y, x_nmc, gamma, beta, feature_dim)

    # (N, feature_dim, M) channels-first layout -> fused fast path.
    x_ncm = jax.random.normal(k2, (N, feature_dim, M), jnp.float32) * 1.5 - 0.3
    y = jax.block_until_ready(batch_norm(x_ncm, gamma, beta, feature_dim))
    _check(y, x_ncm, gamma, beta, feature_dim)

    # (N, feature_dim) 2-D layout -> fused fast path.
    x_nc = jax.random.normal(k3, (8, feature_dim), jnp.float32) + 1.0
    y = jax.block_until_ready(batch_norm(x_nc, gamma, beta, feature_dim))
    _check(y, x_nc, gamma, beta, feature_dim)

    # --- exercise the tiled (large-tensor) paths at small sizes by forcing a
    # --- tiny tile budget, including ragged (masked / clipped) boundary tiles.

    # channels-last tiled, ragged row tiles (FR=12, TFR=8 -> mask + clip).
    c64 = 64
    g64 = 1.0 + 0.01 * jnp.arange(c64, dtype=jnp.float32)
    b64 = 0.02 * jnp.arange(c64, dtype=jnp.float32)
    x_cl = jax.random.normal(k4, (96, c64), jnp.float32) * 0.7 + 0.2
    y = jax.block_until_ready(
        _bn_channels_last_tiled(x_cl, g64, b64, tile_bytes=16 * 1024))
    _check(y, x_cl, g64, b64, c64)

    # channels-first tiled, full-M blocks with ragged N (N=5, BN=2).
    c8 = 8
    g8 = 1.0 + 0.1 * jnp.arange(c8, dtype=jnp.float32)
    b8 = -0.05 * jnp.arange(c8, dtype=jnp.float32)
    x_cf = jax.random.normal(k5, (5, c8, 128), jnp.float32) * 1.2 + 0.1
    y = jax.block_until_ready(
        _bn_channels_first_tiled(x_cf, g8, b8, tile_bytes=8 * 1024))
    _check(y, x_cf, g8, b8, c8)

    # channels-first tiled, split-M accumulator path (TM=128, nm=4).
    g4 = 1.0 + 0.1 * jnp.arange(4, dtype=jnp.float32)
    b4 = 0.05 * jnp.arange(4, dtype=jnp.float32)
    x_cf2 = jax.random.normal(k6, (2, 4, 512), jnp.float32) - 0.4
    y = jax.block_until_ready(
        _bn_channels_first_tiled(x_cf2, g4, b4, tile_bytes=2 * 1024))
    _check(y, x_cf2, g4, b4, 4)

    print("KERNEL_OK")
</pallas_src>

<mosaic_0001>
module attributes {stable_mosaic.version = 11 : i64} {
  func.func @_fused_cl_kernel(%arg0: memref<32x4xf32, #tpu.memory_space<vmem>>, %arg1: memref<1x4xf32, #tpu.memory_space<vmem>>, %arg2: memref<1x4xf32, #tpu.memory_space<vmem>>, %arg3: memref<32x4xf32, #tpu.memory_space<vmem>>) attributes {dimension_semantics = [], scalar_prefetch = 0 : i64, scratch_operands = 0 : i64, tpu.core_type = #tpu.core_type<tc>} {
    %c0 = arith.constant 0 : index
    %c0_0 = arith.constant 0 : index
    %0 = vector.load %arg0[%c0, %c0_0] : memref<32x4xf32, #tpu.memory_space<vmem>>, vector<32x4xf32>
    %cst = arith.constant dense<0.000000e+00> : vector<4xf32>
    %1 = vector.multi_reduction <add>, %0, %cst [0] : vector<32x4xf32> to vector<4xf32>
    %2 = vector.shape_cast %1 : vector<4xf32> to vector<1x4xf32>
    %cst_1 = arith.constant 3.125000e-02 : f32
    %3 = vector.broadcast %cst_1 : f32 to vector<1x4xf32>
    %4 = arith.mulf %2, %3 : vector<1x4xf32>
    %5 = vector.broadcast %4 : vector<1x4xf32> to vector<32x4xf32>
    %6 = arith.subf %0, %5 : vector<32x4xf32>
    %7 = arith.mulf %6, %6 : vector<32x4xf32>
    %cst_2 = arith.constant dense<0.000000e+00> : vector<4xf32>
    %8 = vector.multi_reduction <add>, %7, %cst_2 [0] : vector<32x4xf32> to vector<4xf32>
    %9 = vector.shape_cast %8 : vector<4xf32> to vector<1x4xf32>
    %cst_3 = arith.constant 3.125000e-02 : f32
    %10 = vector.broadcast %cst_3 : f32 to vector<1x4xf32>
    %11 = arith.mulf %9, %10 : vector<1x4xf32>
    %c0_4 = arith.constant 0 : index
    %c0_5 = arith.constant 0 : index
    %12 = vector.load %arg1[%c0_4, %c0_5] : memref<1x4xf32, #tpu.memory_space<vmem>>, vector<1x4xf32>
    %cst_6 = arith.constant 9.99999974E-6 : f32
    %13 = vector.broadcast %cst_6 : f32 to vector<1x4xf32>
    %14 = arith.addf %11, %13 : vector<1x4xf32>
    %15 = math.rsqrt %14 : vector<1x4xf32>
    %16 = arith.mulf %12, %15 : vector<1x4xf32>
    %17 = vector.broadcast %16 : vector<1x4xf32> to vector<32x4xf32>
    %18 = arith.mulf %6, %17 : vector<32x4xf32>
    %c0_7 = arith.constant 0 : index
    %c0_8 = arith.constant 0 : index
    %19 = vector.load %arg2[%c0_7, %c0_8] : memref<1x4xf32, #tpu.memory_space<vmem>>, vector<1x4xf32>
    %20 = vector.broadcast %19 : vector<1x4xf32> to vector<32x4xf32>
    %21 = arith.addf %18, %20 : vector<32x4xf32>
    %c0_9 = arith.constant 0 : index
    %c0_10 = arith.constant 0 : index
    %22 = vector.load %arg3[%c0_9, %c0_10] : memref<32x4xf32, #tpu.memory_space<vmem>>, vector<32x4xf32>
    tpu.vector_store %arg3[%c0_9, %c0_10], %21 {strides = array<i32>} : memref<32x4xf32, #tpu.memory_space<vmem>>, vector<32x4xf32>,
    return
  }
}

</mosaic_0001>

<llo_original>
// kernel: tpu_custom_call.1
$region0: #{tpu_custom_call.1}
  #allocation0 [shape = 'u32[]', space=smem, size = 0x4, offset = 0x4, fixed_abs, tag = 'smem constant byte address 0x4 - core index']
  #allocation1 [shape = 'u32[144,128]{1,0:T(1,128)}', space=vmem, size = 0x12000, scoped, tag = 'internal scratch']
  %s0 = inlined_call_operand.vmem [shape: f32[32,4], index: 0, kind: input, shape index: {}]
  %s1 = inlined_call_operand.vmem [shape: f32[1,4], index: 1, kind: input, shape index: {}]
  %s2 = inlined_call_operand.vmem [shape: f32[1,4], index: 2, kind: input, shape index: {}]
  %s3 = inlined_call_operand.vmem [shape: f32[32,4], index: 3, kind: output, shape index: {}]
  %s4 = sld [smem:[#allocation0]]
  $region22: #{tpu_custom_call.1} parent=0
    _
  %s6 = ssub.s32 1, %s4
  %s7 = scalar_select 0, %s6, %s4
  // Predicated region
  $region2: #{tpu_custom_call.1} parent=0 // pred_check
    _
  $region3: #{tpu_custom_call.1} parent=0 // pred_check_branch
    %9 = sbr.rel (0) target = $region5
  $region4: #{tpu_custom_call.1} parent=0 // pred_region
    _
  $region5: #{tpu_custom_call.1} parent=0 // pred_fallthru
    _
  // Predicated region
  $region6: #{tpu_custom_call.1} parent=0 // pred_check
    _
  $region7: #{tpu_custom_call.1} parent=0 // pred_check_branch
    %11 = sbr.rel (0) target = $region9
  $region8: #{tpu_custom_call.1} parent=0 // pred_region
    _
  $region9: #{tpu_custom_call.1} parent=0 // pred_fallthru
    _
  // Predicated region
  $region10: #{tpu_custom_call.1} parent=0 // pred_check
    _
  $region11: #{tpu_custom_call.1} parent=0 // pred_check_branch
    %13 = sbr.rel (0) target = $region13
  $region12: #{tpu_custom_call.1} parent=0 // pred_region
    _
  $region13: #{tpu_custom_call.1} parent=0 // pred_fallthru
    _
  %v14 = vld [vmem:[%s0] sm:$0xff]
  %v15 = vld [vmem:[%s0 + $0x8] sm:$0xff]
  %v16 = vld [vmem:[%s0 + $0x10] sm:$0xff]
  %v17 = vld [vmem:[%s0 + $0x18] sm:$0xff]
  %vm18 = vcmask 31744
  %v19 = vsel %vm18, %v14, 0.0
  %v20 = vsel %vm18, %v15, 0.0
  %v21 = vadd.f32 %v19, %v20
  %v22 = vsel %vm18, %v16, 0.0
  %v23 = vadd.f32 %v21, %v22
  %v24 = vsel %vm18, %v17, 0.0
  %v25 = vadd.f32 %v23, %v24
  %v26 = vrot.slane %v25, 4
  %v27 = vadd.f32 %v25, %v26
  %v28 = vrot.slane %v27, 2
  %v29 = vadd.f32 %v27, %v28
  %v30 = vrot.slane %v29, 1
  %v31 = vadd.f32 %v29, %v30
  %v32 = vmul.f32 %v31, 0.03125
  %v33 = vsub.f32 %v14, %v32
  %v34 = vsub.f32 %v15, %v32
  %v35 = vsub.f32 %v16, %v32
  %v36 = vsub.f32 %v17, %v32
  %v37 = vmul.f32 %v33, %v33
  %v38 = vmul.f32 %v34, %v34
  %v39 = vmul.f32 %v35, %v35
  %v40 = vmul.f32 %v36, %v36
  %v41 = vsel %vm18, %v37, 0.0
  %v42 = vsel %vm18, %v38, 0.0
  %v43 = vadd.f32 %v41, %v42
  %v44 = vsel %vm18, %v39, 0.0
  %v45 = vadd.f32 %v43, %v44
  %v46 = vsel %vm18, %v40, 0.0
  %v47 = vadd.f32 %v45, %v46
  %v48 = vrot.slane %v47, 4
  %v49 = vadd.f32 %v47, %v48
  %v50 = vrot.slane %v49, 2
  %v51 = vadd.f32 %v49, %v50
  %v52 = vrot.slane %v51, 1
  %v53 = vadd.f32 %v51, %v52
  %v54 = vmul.f32 %v53, 0.03125
  %v55 = vld [vmem:[%s1] sm:$0x1]
  %v56 = vadd.f32 %v54, 1e-05
  %v57 = vrsqrt.pop %v56
  %v58 = vmul.f32 %v55, %v57
  %v60 = vlaneseq
  %v61 = vshrl.u32 %v60, 7
  %v62 = vsub.s32 0, %v61
  %v63 = vrot.slane %v58, %v62
  %v65 = vmul.f32 %v33, %v63
  %v66 = vmul.f32 %v34, %v63
  %v67 = vmul.f32 %v35, %v63
  %v68 = vmul.f32 %v36, %v63
  %v69 = vld [vmem:[%s2] sm:$0x1]
  %v71 = vlaneseq
  %v72 = vshrl.u32 %v71, 7
  %v73 = vsub.s32 0, %v72
  %v74 = vrot.slane %v69, %v73
  %v76 = vadd.f32 %v65, %v74
  %v77 = vadd.f32 %v66, %v74
  %v78 = vadd.f32 %v67, %v74
  %v79 = vadd.f32 %v68, %v74
  %80 = vst.msk [vmem:[%s3] sm:$0xff] %vm18, %v76
  %81 = vst.msk [vmem:[%s3 + $0x8] sm:$0xff] %vm18, %v77
  %82 = vst.msk [vmem:[%s3 + $0x10] sm:$0xff] %vm18, %v78
  %83 = vst.msk [vmem:[%s3 + $0x18] sm:$0xff] %vm18, %v79
  // Predicated region
  $region14: #{tpu_custom_call.1} parent=0 // pred_check
    _
  $region15: #{tpu_custom_call.1} parent=0 // pred_check_branch
    %85 = sbr.rel (0) target = $region17
  $region16: #{tpu_custom_call.1} parent=0 // pred_region
    _
  $region17: #{tpu_custom_call.1} parent=0 // pred_fallthru
    _
  // Predicated region
  $region18: #{tpu_custom_call.1} parent=0 // pred_check
    _
  $region19: #{tpu_custom_call.1} parent=0 // pred_check_branch
    %87 = sbr.rel (0) target = $region21
  $region20: #{tpu_custom_call.1} parent=0 // pred_region
    _
  $region21: #{tpu_custom_call.1} parent=0 // pred_fallthru
    _

</llo_original>
